<compile_context>
chip_gen: v5e
topology: v5e:2x2
jax: 0.10.0
libtpu: 0.0.40
codegen_flags: <defaults>
</compile_context>

<pallas_src>
import jax
import jax.numpy as jnp
from jax.experimental import pallas as pl
from jax.experimental.pallas import tpu as pltpu

_MiB = 1024 * 1024


def _divisors(n):
    ds = set()
    i = 1
    while i * i <= n:
        if n % i == 0:
            ds.add(i)
            ds.add(n // i)
        i += 1
    return sorted(ds)


def _vmem_capacity_bytes():
    try:
        return int(pltpu.get_tpu_info().vmem_capacity_bytes)
    except Exception:
        return 64 * _MiB  # conservative (v7x per-TensorCore VMEM)


def _pick_tiles(B, C, HW, elem_budget, sublane):
    """Pick (TB, TC, THW) dividing (B, C, HW) exactly and obeying TPU tiling:
    TC is a multiple of `sublane` or == C; THW is a multiple of 128 or == HW."""
    hw_aligned = [d for d in _divisors(HW) if d % 128 == 0]
    c_aligned = [d for d in _divisors(C) if d % sublane == 0]

    if C * HW <= elem_budget:
        # Whole (C, HW) slab fits per batch row.  Batch up rows per step, but
        # keep >= 2 batch tiles so the "parallel" axis feeds both v7x cores.
        tb_cap = B // 2 if B >= 2 else 1
        TB = 1
        for d in _divisors(B):
            if TB < d <= tb_cap and d * C * HW <= elem_budget:
                TB = d
        return TB, C, HW

    if HW <= elem_budget:
        # Chunk along C with sublane-aligned tiles.
        tc = max((d for d in c_aligned if d * HW <= elem_budget), default=None)
        if tc is not None:
            return 1, tc, HW

    # Chunk along HW (lane-aligned).  Smallest legal TC.
    tc = min(c_aligned) if c_aligned else C
    thw = max((d for d in hw_aligned if tc * d <= elem_budget), default=None)
    if thw is None:
        # No aligned HW divisor fits the budget: take the smallest aligned one,
        # or fall back to the full (always-legal) dimension.
        thw = min(hw_aligned) if hw_aligned else HW
    return 1, tc, thw


def _make_kernel(inv_denom):
    def kernel(pred_ref, gt_ref, mask_ref, out_ref):
        h = pl.program_id(1)
        c = pl.program_id(2)
        is_first = jnp.logical_and(h == 0, c == 0)
        is_last = jnp.logical_and(h == pl.num_programs(1) - 1,
                                  c == pl.num_programs(2) - 1)

        @pl.when(is_first)
        def _init():
            out_ref[...] = jnp.zeros_like(out_ref)

        # Upcast in-register only: HBM traffic stays at native dtype width.
        p = pred_ref[...].astype(jnp.float32)   # (TB, TC, THW)
        g = gt_ref[...].astype(jnp.float32)     # (TB, TC, THW)
        m = mask_ref[...].astype(jnp.float32)   # (TB, 1,  THW)
        d = p - g
        sq = d * d * m                          # mask broadcast over C

        partial = jnp.sum(sq, axis=(1, 2))      # (TB,) per-batch chunk sums
        # Lane-dense accumulator block (1, TB, 128): unmasked stores on writeback.
        out_ref[...] += partial[None, :, None]

        @pl.when(is_last)
        def _finalize():
            out_ref[...] = out_ref[...] * inv_denom

    return kernel


def heatmap_loss(pred, gt, masks):
    assert pred.shape == gt.shape
    B, C, H, W = pred.shape
    assert masks.shape == (B, H, W)
    HW = H * W

    # Lane-dense layout; reshapes are free (contiguous trailing dims).
    pred2 = pred.reshape(B, C, HW)
    gt2 = gt.reshape(B, C, HW)
    mask2 = masks.reshape(B, 1, HW)

    itemsize = int(jnp.dtype(pred.dtype).itemsize)
    sublane = max(8, 32 // max(itemsize, 1))     # 8 (f32) / 16 (bf16) / 32 (i8)

    # Per-input HBM-side block budget (~4 MiB amortizes per-step overhead on
    # fast-HBM chips; trivially safe once vmem_limit_bytes is set explicitly).
    block_budget_bytes = 4 * _MiB
    elem_budget = block_budget_bytes // itemsize

    TB, TC, THW = _pick_tiles(B, C, HW, elem_budget, sublane)
    n_b, n_c, n_hw = B // TB, C // TC, HW // THW
    inv_denom = 1.0 / float(C * H * W)

    # Generation-aware scoped-VMEM limit: cover double-buffered inputs plus the
    # f32 elementwise temporaries, with headroom under physical VMEM.
    cap = _vmem_capacity_bytes()
    base_limit = 64 * _MiB if cap >= 100 * _MiB else 48 * _MiB
    block_elems = TB * TC * THW
    mask_bytes = TB * THW * int(jnp.dtype(masks.dtype).itemsize)
    est = (2 * (2 * block_elems * itemsize + mask_bytes)   # pipeline buffers
           + 3 * block_elems * 4                            # f32 temporaries
           + 2 * TB * 128 * 4)                              # output accumulator
    vmem_limit = int(max(base_limit,
                         min(int(1.25 * est) + _MiB, cap - 8 * _MiB)))

    out = pl.pallas_call(
        _make_kernel(inv_denom),
        out_shape=jax.ShapeDtypeStruct((n_b, TB, 128), jnp.float32),
        grid=(n_b, n_hw, n_c),
        in_specs=[
            pl.BlockSpec((TB, TC, THW), lambda b, h, c: (b, c, h)),
            pl.BlockSpec((TB, TC, THW), lambda b, h, c: (b, c, h)),
            # C innermost: mask block index constant across it -> fetched once
            # per (batch tile, HW chunk), never broadcast over C in HBM.
            pl.BlockSpec((TB, 1, THW), lambda b, h, c: (b, 0, h)),
        ],
        out_specs=pl.BlockSpec((1, TB, 128), lambda b, h, c: (b, 0, 0)),
        compiler_params=pltpu.CompilerParams(
            dimension_semantics=("parallel", "arbitrary", "arbitrary"),
            vmem_limit_bytes=vmem_limit),
    )(pred2, gt2, mask2)
    return out[:, :, 0].reshape(B)


def heatmap_loss_ref(pred, gt, masks):
    l = (pred.astype(jnp.float32) - gt.astype(jnp.float32)) ** 2 \
        * masks.astype(jnp.float32)[:, None, :, :]
    return l.mean(axis=3).mean(axis=2).mean(axis=1)


if __name__ == "__main__":
    B, C, H, W = 2, 4, 16, 16
    key = jax.random.PRNGKey(0)
    kp, kg, km = jax.random.split(key, 3)
    pred = jax.random.normal(kp, (B, C, H, W), dtype=jnp.float32)
    gt = jax.random.normal(kg, (B, C, H, W), dtype=jnp.float32)
    masks = (jax.random.uniform(km, (B, H, W)) > 0.2).astype(jnp.float32)

    out = jax.block_until_ready(heatmap_loss(pred, gt, masks))
    ref = heatmap_loss_ref(pred, gt, masks)
    assert out.shape == (B,)
    assert jnp.allclose(out, ref, rtol=1e-5, atol=1e-6)
    print("KERNEL_OK")
</pallas_src>

<mosaic_0001>
module attributes {stable_mosaic.version = 11 : i64} {
  func.func @kernel(%arg0: i32, %arg1: i32, %arg2: i32, %arg3: memref<1x4x256xf32, #tpu.memory_space<vmem>>, %arg4: memref<1x4x256xf32, #tpu.memory_space<vmem>>, %arg5: memref<1x1x256xf32, #tpu.memory_space<vmem>>, %arg6: memref<1x1x128xf32, #tpu.memory_space<vmem>>) attributes {dimension_semantics = [#tpu.dimension_semantics<parallel>, #tpu.dimension_semantics<arbitrary>, #tpu.dimension_semantics<arbitrary>], iteration_bounds = array<i64: 2, 1, 1>, scalar_prefetch = 0 : i64, scratch_operands = 0 : i64, tpu.core_type = #tpu.core_type<tc>, window_params = [{transform_indices = @transform_0, window_bounds = array<i64: 1, 4, 256>}, {transform_indices = @transform_1, window_bounds = array<i64: 1, 4, 256>}, {transform_indices = @transform_2, window_bounds = array<i64: 1, 1, 256>}, {transform_indices = @transform_3, window_bounds = array<i64: 1, 1, 128>}]} {
    %c0_i32 = arith.constant 0 : i32
    %0 = arith.cmpi eq, %arg1, %c0_i32 : i32
    %c0_i32_0 = arith.constant 0 : i32
    %1 = arith.cmpi eq, %arg2, %c0_i32_0 : i32
    %2 = arith.andi %0, %1 : i1
    %c0_i32_1 = arith.constant 0 : i32
    %3 = arith.cmpi eq, %arg1, %c0_i32_1 : i32
    %c0_i32_2 = arith.constant 0 : i32
    %4 = arith.cmpi eq, %arg2, %c0_i32_2 : i32
    %5 = arith.andi %3, %4 : i1
    %6 = arith.extui %2 : i1 to i32
    %c0_i32_3 = arith.constant 0 : i32
    %7 = arith.cmpi ne, %6, %c0_i32_3 : i32
    scf.if %7 {
      %cst_19 = arith.constant 0.000000e+00 : f32
      %23 = vector.broadcast %cst_19 : f32 to vector<1x1x128xf32>
      %c0_20 = arith.constant 0 : index
      %c0_21 = arith.constant 0 : index
      %c0_22 = arith.constant 0 : index
      %24 = vector.load %arg6[%c0_20, %c0_21, %c0_22] : memref<1x1x128xf32, #tpu.memory_space<vmem>>, vector<1x1x128xf32>
      tpu.vector_store %arg6[%c0_20, %c0_21, %c0_22], %23 {strides = array<i32>} : memref<1x1x128xf32, #tpu.memory_space<vmem>>, vector<1x1x128xf32>,
    } else {
    }
    %c0 = arith.constant 0 : index
    %c0_4 = arith.constant 0 : index
    %c0_5 = arith.constant 0 : index
    %8 = vector.load %arg3[%c0, %c0_4, %c0_5] : memref<1x4x256xf32, #tpu.memory_space<vmem>>, vector<1x4x256xf32>
    %c0_6 = arith.constant 0 : index
    %c0_7 = arith.constant 0 : index
    %c0_8 = arith.constant 0 : index
    %9 = vector.load %arg4[%c0_6, %c0_7, %c0_8] : memref<1x4x256xf32, #tpu.memory_space<vmem>>, vector<1x4x256xf32>
    %c0_9 = arith.constant 0 : index
    %c0_10 = arith.constant 0 : index
    %c0_11 = arith.constant 0 : index
    %10 = vector.load %arg5[%c0_9, %c0_10, %c0_11] : memref<1x1x256xf32, #tpu.memory_space<vmem>>, vector<1x1x256xf32>
    %11 = arith.subf %8, %9 : vector<1x4x256xf32>
    %12 = arith.mulf %11, %11 : vector<1x4x256xf32>
    %13 = vector.broadcast %10 : vector<1x1x256xf32> to vector<1x4x256xf32>
    %14 = arith.mulf %12, %13 : vector<1x4x256xf32>
    %cst = arith.constant dense<0.000000e+00> : vector<1xf32>
    %15 = vector.multi_reduction <add>, %14, %cst [1, 2] : vector<1x4x256xf32> to vector<1xf32>
    %c0_12 = arith.constant 0 : index
    %c0_13 = arith.constant 0 : index
    %c0_14 = arith.constant 0 : index
    %16 = vector.load %arg6[%c0_12, %c0_13, %c0_14] : memref<1x1x128xf32, #tpu.memory_space<vmem>>, vector<1x1x128xf32>
    %17 = vector.shape_cast %15 : vector<1xf32> to vector<1x1x1xf32>
    %18 = vector.broadcast %17 : vector<1x1x1xf32> to vector<1x1x128xf32>
    %19 = arith.addf %16, %18 : vector<1x1x128xf32>
    %c0_15 = arith.constant 0 : index
    %c0_16 = arith.constant 0 : index
    %c0_17 = arith.constant 0 : index
    %20 = vector.load %arg6[%c0_15, %c0_16, %c0_17] : memref<1x1x128xf32, #tpu.memory_space<vmem>>, vector<1x1x128xf32>
    tpu.vector_store %arg6[%c0_15, %c0_16, %c0_17], %19 {strides = array<i32>} : memref<1x1x128xf32, #tpu.memory_space<vmem>>, vector<1x1x128xf32>,
    %21 = arith.extui %5 : i1 to i32
    %c0_i32_18 = arith.constant 0 : i32
    %22 = arith.cmpi ne, %21, %c0_i32_18 : i32
    scf.if %22 {
      %c0_19 = arith.constant 0 : index
      %c0_20 = arith.constant 0 : index
      %c0_21 = arith.constant 0 : index
      %23 = vector.load %arg6[%c0_19, %c0_20, %c0_21] : memref<1x1x128xf32, #tpu.memory_space<vmem>>, vector<1x1x128xf32>
      %cst_22 = arith.constant 9.765625E-4 : f32
      %24 = vector.broadcast %cst_22 : f32 to vector<1x1x128xf32>
      %25 = arith.mulf %23, %24 : vector<1x1x128xf32>
      %c0_23 = arith.constant 0 : index
      %c0_24 = arith.constant 0 : index
      %c0_25 = arith.constant 0 : index
      %26 = vector.load %arg6[%c0_23, %c0_24, %c0_25] : memref<1x1x128xf32, #tpu.memory_space<vmem>>, vector<1x1x128xf32>
      tpu.vector_store %arg6[%c0_23, %c0_24, %c0_25], %25 {strides = array<i32>} : memref<1x1x128xf32, #tpu.memory_space<vmem>>, vector<1x1x128xf32>,
    } else {
    }
    return
  }
  func.func @transform_0(%arg0: i32, %arg1: i32, %arg2: i32) -> (i32, i32, i32) {
    %c0_i32 = arith.constant 0 : i32
    return %arg0, %arg2, %arg1 : i32, i32, i32
  }
  func.func @transform_1(%arg0: i32, %arg1: i32, %arg2: i32) -> (i32, i32, i32) {
    %c0_i32 = arith.constant 0 : i32
    return %arg0, %arg2, %arg1 : i32, i32, i32
  }
  func.func @transform_2(%arg0: i32, %arg1: i32, %arg2: i32) -> (i32, i32, i32) {
    %c0_i32 = arith.constant 0 : i32
    %c0_i32_0 = arith.constant 0 : i32
    return %arg0, %c0_i32, %arg1 : i32, i32, i32
  }
  func.func @transform_3(%arg0: i32, %arg1: i32, %arg2: i32) -> (i32, i32, i32) {
    %c0_i32 = arith.constant 0 : i32
    %c0_i32_0 = arith.constant 0 : i32
    %c0_i32_1 = arith.constant 0 : i32
    return %arg0, %c0_i32, %c0_i32_0 : i32, i32, i32
  }
}

</mosaic_0001>

<llo_original>
// kernel: tpu_custom_call.1
$region0: #{tpu_custom_call.1}
  #allocation0 [shape = 'u32[]', space=smem, size = 0x4, offset = 0x4, fixed_abs, tag = 'smem constant byte address 0x4 - core index']
  #allocation1 [shape = 'u32[72,128]{1,0:T(1,128)}', space=vmem, size = 0x9000, scoped, tag = 'internal scratch']
  %s0 = inlined_call_operand.hbm [shape: f32[2,4,256], index: 0, kind: input, shape index: {}]
  %s1 = inlined_call_operand.hbm [shape: f32[2,4,256], index: 1, kind: input, shape index: {}]
  %s2 = inlined_call_operand.hbm [shape: f32[2,1,256], index: 2, kind: input, shape index: {}]
  %s3 = inlined_call_operand.hbm [shape: f32[2,1,128], index: 3, kind: output, shape index: {}]
  %s4 = sld [smem:[#allocation0]]
  $region65: #{tpu_custom_call.1} parent=0
    _
  %s6 = ssub.s32 1, %s4
  %s7 = scalar_select 0, %s6, %s4
  $region1: #{tpu_custom_call.1} parent=0
    #allocation2 [shape = 'u8[8192]{0}', space=vmem, size = 0x2000, scoped, tag = 'input window, operand 0']
    #allocation3 [shape = 's32[2]{0}', space=sflag, size = 0x8, scoped, tag = 'scoped memory for tpu_custom_call.1']
    #allocation4 [shape = 's32[2]{0}', space=sflag, size = 0x8, scoped, tag = 'scoped memory for tpu_custom_call.1']
    #allocation5 [shape = 'u8[8192]{0}', space=vmem, size = 0x2000, scoped, tag = 'input window, operand 1']
    #allocation6 [shape = 's32[2]{0}', space=sflag, size = 0x8, scoped, tag = 'scoped memory for tpu_custom_call.1']
    #allocation7 [shape = 'u8[2048]{0}', space=vmem, size = 0x800, scoped, tag = 'input window, operand 2']
    #allocation8 [shape = 'u8[1024]{0}', space=vmem, size = 0x400, scoped, tag = 'output window, operand 0']
    %8 = vsyncpa [#allocation3], 0
    %s9 = scalar_lea.sflag [#allocation3], 1
    %10 = vsyncpa %s9, 0
    %11 = vsyncpa [#allocation6], 0
    %s12 = scalar_lea.sflag [#allocation6], 1
    %13 = vsyncpa %s12, 0
    %14 = vsyncpa [#allocation4], 0
    %s15 = scalar_lea.sflag [#allocation4], 1
    %16 = vsyncpa %s15, 0
    loop: start=0, step=1, limit=4
    $region2: #{tpu_custom_call.1} parent=1 // loop_pre_header
      _
    $region3: #{tpu_custom_call.1} parent=1 // loop_header
      %s18 = sphi 0, %s22
      %p19 = scmp.ge.s32.totalorder %s18, 4
      %s25 = sphi 0, %s44
      %s26 = sphi 0, %s40
      %s27 = sphi 0, %s36
      %s28 = sphi 0, %s25
      %s29 = sphi 0, %s26
      %s30 = sphi 0, %s27
      %s31 = sphi 0, %s28
      %s32 = sphi 0, %s29
      %s33 = sphi 0, %s30
      %s51 = sphi 0, %s53
      %s54 = sphi 0, %s51
      %s55 = sphi 0, %s54
      %s71 = sphi 0, %s55
      %s81 = sphi 0, %s83
      %s84 = sphi 0, %s81
      %s85 = sphi 0, %s84
      %s101 = sphi 0, %s85
      %s109 = sphi 0, %s111
      %s112 = sphi 0, %s109
      %s113 = sphi 0, %s112
      %s129 = sphi 0, %s113
      %s135 = sphi 0, %s137
      %s138 = sphi 0, %s135
      %s139 = sphi 0, %s138
      %s155 = sphi 0, %s139
    $region4: #{tpu_custom_call.1} parent=1 // loop_header_branch
      %21 = sbr.rel (%p19) target = $region8
    $region5: #{tpu_custom_call.1} parent=1 // loop_body
      %s23 = ssub.s32 %s18, 1
      %s24 = ssub.s32 %s18, 2
      %s34 = sadd.s32 1, %s27
      %p35 = scmp.ge.s32.totalorder %s34, 1
      %s36 = scalar_select %p35, 0, %s34
      %s37 = sadd.s32 1, %s26
      %s38 = scalar_select %p35, %s37, %s26
      %p39 = scmp.ge.s32.totalorder %s38, 1
      %s40 = scalar_select %p39, 0, %s38
      %s41 = sadd.s32 1, %s25
      %s42 = scalar_select %p39, %s41, %s25
      %p43 = scmp.ge.s32.totalorder %s42, 2
      %s44 = scalar_select %p43, 0, %s42
      %s45 = ssub.s32 %s25, %s44
      %s46 = ssub.s32 %s27, %s36
      %s47 = sor.u32 %s45, %s46
      %s48 = ssub.s32 %s26, %s40
      %s49 = sor.u32 %s47, %s48
      %p50 = scmp.eq.s32.totalorder %s49, 0
      %s52 = sadd.s32 %s51, 1
      %s53 = scalar_select %p50, %s51, %s52
      %p56 = pneg %p50
      %p57 = scmp.eq.s32.totalorder %s18, 1
      %p58 = por %p56, %p57
      %p59 = scmp.ne.s32.totalorder %s51, %s54
      %p60 = scmp.eq.s32.totalorder %s18, 0
      %p61 = por %p59, %p60
      %p62 = scmp.ne.s32.totalorder %s51, %s54
      %p63 = scmp.eq.s32.totalorder %s23, 1
      %p64 = por %p62, %p63
      %p65 = scmp.ne.s32.totalorder %s54, %s55
      %p66 = scmp.eq.s32.totalorder %s23, 0
      %p67 = por %p65, %p66
      %p68 = scmp.ne.s32.totalorder %s54, %s55
      %p69 = scmp.eq.s32.totalorder %s24, 1
      %p70 = por %p68, %p69
      %p72 = scmp.ne.s32.totalorder %s55, %s71
      %p73 = scmp.eq.s32.totalorder %s24, 0
      %p74 = por %p72, %p73
      %s75 = ssub.s32 %s25, %s44
      %s76 = ssub.s32 %s27, %s36
      %s77 = sor.u32 %s75, %s76
      %s78 = ssub.s32 %s26, %s40
      %s79 = sor.u32 %s77, %s78
      %p80 = scmp.eq.s32.totalorder %s79, 0
      %s82 = sadd.s32 %s81, 1
      %s83 = scalar_select %p80, %s81, %s82
      %p86 = pneg %p80
      %p87 = scmp.eq.s32.totalorder %s18, 1
      %p88 = por %p86, %p87
      %p89 = scmp.ne.s32.totalorder %s81, %s84
      %p90 = scmp.eq.s32.totalorder %s18, 0
      %p91 = por %p89, %p90
      %p92 = scmp.ne.s32.totalorder %s81, %s84
      %p93 = scmp.eq.s32.totalorder %s23, 1
      %p94 = por %p92, %p93
      %p95 = scmp.ne.s32.totalorder %s84, %s85
      %p96 = scmp.eq.s32.totalorder %s23, 0
      %p97 = por %p95, %p96
      %p98 = scmp.ne.s32.totalorder %s84, %s85
      %p99 = scmp.eq.s32.totalorder %s24, 1
      %p100 = por %p98, %p99
      %p102 = scmp.ne.s32.totalorder %s85, %s101
      %p103 = scmp.eq.s32.totalorder %s24, 0
      %p104 = por %p102, %p103
      %s105 = ssub.s32 %s25, %s44
      %s106 = ssub.s32 %s26, %s40
      %s107 = sor.u32 %s105, %s106
      %p108 = scmp.eq.s32.totalorder %s107, 0
      %s110 = sadd.s32 %s109, 1
      %s111 = scalar_select %p108, %s109, %s110
      %p114 = pneg %p108
      %p115 = scmp.eq.s32.totalorder %s18, 1
      %p116 = por %p114, %p115
      %p117 = scmp.ne.s32.totalorder %s109, %s112
      %p118 = scmp.eq.s32.totalorder %s18, 0
      %p119 = por %p117, %p118
      %p120 = scmp.ne.s32.totalorder %s109, %s112
      %p121 = scmp.eq.s32.totalorder %s23, 1
      %p122 = por %p120, %p121
      %p123 = scmp.ne.s32.totalorder %s112, %s113
      %p124 = scmp.eq.s32.totalorder %s23, 0
      %p125 = por %p123, %p124
      %p126 = scmp.ne.s32.totalorder %s112, %s113
      %p127 = scmp.eq.s32.totalorder %s24, 1
      %p128 = por %p126, %p127
      %p130 = scmp.ne.s32.totalorder %s113, %s129
      %p131 = scmp.eq.s32.totalorder %s24, 0
      %p132 = por %p130, %p131
      %s133 = ssub.s32 %s25, %s44
      %p134 = scmp.eq.s32.totalorder %s133, 0
      %s136 = sadd.s32 %s135, 1
      %s137 = scalar_select %p134, %s135, %s136
      %p140 = pneg %p134
      %p141 = scmp.eq.s32.totalorder %s18, 1
      %p142 = por %p140, %p141
      %p143 = scmp.ne.s32.totalorder %s135, %s138
      %p144 = scmp.eq.s32.totalorder %s18, 0
      %p145 = por %p143, %p144
      %p146 = scmp.ne.s32.totalorder %s135, %s138
      %p147 = scmp.eq.s32.totalorder %s23, 1
      %p148 = por %p146, %p147
      %p149 = scmp.ne.s32.totalorder %s138, %s139
      %p150 = scmp.eq.s32.totalorder %s23, 0
      %p151 = por %p149, %p150
      %p152 = scmp.ne.s32.totalorder %s138, %s139
      %p153 = scmp.eq.s32.totalorder %s24, 1
      %p154 = por %p152, %p153
      %p156 = scmp.ne.s32.totalorder %s139, %s155
      %p157 = scmp.eq.s32.totalorder %s24, 0
      %p158 = por %p156, %p157
      %p159 = scmp.le.s32.totalorder 1, %s18
      %p160 = scmp.lt.s32.totalorder %s18, 3
      %p161 = pnand %p159, %p160
      %p162 = pneg %p161
      // Predicated region
      $region9: #{tpu_custom_call.1} parent=5 // pred_check
        _
      $region10: #{tpu_custom_call.1} parent=5 // pred_check_branch
        %164 = sbr.rel (%p161) target = $region12
      $region11: #{tpu_custom_call.1} parent=5 // pred_region
        %s165 = ssub.s32 %s18, 1
      $region12: #{tpu_custom_call.1} parent=5 // pred_fallthru
        _
      %p166 = scmp.lt.s32.totalorder %s18, 2
      // Predicated region
      $region13: #{tpu_custom_call.1} parent=5 // pred_check
        %p167 = pneg %p166
      $region14: #{tpu_custom_call.1} parent=5 // pred_check_branch
        %169 = sbr.rel (%p167) target = $region16
      $region15: #{tpu_custom_call.1} parent=5 // pred_region
        // Predicated region
        $region17: #{tpu_custom_call.1} parent=15 // pred_check
          %p170 = pneg %p61
        $region18: #{tpu_custom_call.1} parent=15 // pred_check_branch
          %172 = sbr.rel (%p170) target = $region20
        $region19: #{tpu_custom_call.1} parent=15 // pred_region
          %s173 = sand.u32 %s51, 1
          %s174 = scalar_lea.sflag [#allocation3], %s173
          %s175 = sand.u32 %s51, 1
          %s176 = smul.addr %s175, 8
          %s177 = scalar_lea.vmem [#allocation2], %s176
          %s178 = smul.u32 2, %s26
          %180 = vsyncadd %s174, 0
          %s181 = smul.addr %s27, 2
          %s182 = sadd.s32 %s178, %s181
          %s183 = smul.addr %s25, 2
          %s184 = sadd.s32 %s182, %s183
          %s185 = smul.addr %s184, 4
          %s186 = scalar_lea.hbm %s0, %s185
          %s188 = sshll.u32 %s186, 4
          %s189 = int_to_ptr.hbm [resolvable:$true] %s188
          %s190 = sshll.u32 %s177, 4
          %s191 = int_to_ptr.vmem [resolvable:$true] %s190
          %193 = dma.hbm_to_vmem [thread:$0]  %s189, 128, %s191, %s174
        $region20: #{tpu_custom_call.1} parent=15 // pred_fallthru
          _
        // Predicated region
        $region21: #{tpu_custom_call.1} parent=15 // pred_check
          %p194 = pneg %p91
        $region22: #{tpu_custom_call.1} parent=15 // pred_check_branch
          %196 = sbr.rel (%p194) target = $region24
        $region23: #{tpu_custom_call.1} parent=15 // pred_region
          %s197 = sand.u32 %s18, 1
          %s198 = scalar_lea.sflag [#allocation6], %s197
          %s199 = sand.u32 %s81, 1
          %s200 = smul.addr %s199, 8
          %s201 = scalar_lea.vmem [#allocation5], %s200
          %s202 = smul.u32 2, %s26
          %204 = vsyncadd %s198, 0
          %s205 = smul.addr %s27, 2
          %s206 = sadd.s32 %s202, %s205
          %s207 = smul.addr %s25, 2
          %s208 = sadd.s32 %s206, %s207
          %s209 = smul.addr %s208, 4
          %s210 = scalar_lea.hbm %s1, %s209
          %s212 = sshll.u32 %s210, 4
          %s213 = int_to_ptr.hbm [resolvable:$true] %s212
          %s214 = sshll.u32 %s201, 4
          %s215 = int_to_ptr.vmem [resolvable:$true] %s214
          %217 = dma.hbm_to_vmem [thread:$0]  %s213, 128, %s215, %s198
        $region24: #{tpu_custom_call.1} parent=15 // pred_fallthru
          _
        // Predicated region
        $region25: #{tpu_custom_call.1} parent=15 // pred_check
          %p218 = pneg %p119
        $region26: #{tpu_custom_call.1} parent=15 // pred_check_branch
          %220 = sbr.rel (%p218) target = $region28
        $region27: #{tpu_custom_call.1} parent=15 // pred_region
          %s221 = sand.u32 %s18, 1
          %s222 = scalar_lea.sflag [#allocation6], %s221
          %s223 = sand.u32 %s109, 1
          %s224 = smul.addr %s223, 2
          %s225 = scalar_lea.vmem [#allocation7], %s224
          %s226 = smul.u32 2, %s26
          %228 = vsyncadd %s222, 0
          %s229 = smul.addr %s25, 2
          %s230 = sadd.s32 %s226, %s229
          %s231 = scalar_lea.hbm %s2, %s230
          %s233 = sshll.u32 %s231, 4
          %s234 = int_to_ptr.hbm [resolvable:$true] %s233
          %s235 = sshll.u32 %s225, 4
          %s236 = int_to_ptr.vmem [resolvable:$true] %s235
          %238 = dma.hbm_to_vmem [thread:$0]  %s234, 32, %s236, %s222
        $region28: #{tpu_custom_call.1} parent=15 // pred_fallthru
          _
      $region16: #{tpu_custom_call.1} parent=5 // pred_fallthru
        _
      %p239 = scmp.le.s32.totalorder 1, %s18
      %p240 = scmp.lt.s32.totalorder %s18, 3
      %p241 = pnand %p239, %p240
      %p242 = pneg %p241
      // Predicated region
      $region29: #{tpu_custom_call.1} parent=5 // pred_check
        _
      $region30: #{tpu_custom_call.1} parent=5 // pred_check_branch
        %244 = sbr.rel (%p241) target = $region32
      $region31: #{tpu_custom_call.1} parent=5 // pred_region
        %s245 = ssub.s32 %s18, 1
        %s246 = sand.u32 %s54, 1
        %s247 = scalar_lea.sflag [#allocation3], %s246
        %s248 = sand.u32 %s54, 1
        %s249 = smul.addr %s248, 8
        %s250 = scalar_lea.vmem [#allocation2], %s249
        // Predicated region
        $region33: #{tpu_custom_call.1} parent=31 // pred_check
          %p251 = pneg %p67
        $region34: #{tpu_custom_call.1} parent=31 // pred_check_branch
          %253 = sbr.rel (%p251) target = $region36
        $region35: #{tpu_custom_call.1} parent=31 // pred_region
          %255 = dma.done %s247, 128
        $region36: #{tpu_custom_call.1} parent=31 // pred_fallthru
          _
        %s256 = sand.u32 %s23, 1
        %s257 = scalar_lea.sflag [#allocation6], %s256
        %s258 = sand.u32 %s84, 1
        %s259 = smul.addr %s258, 8
        %s260 = scalar_lea.vmem [#allocation5], %s259
        // Predicated region
        $region37: #{tpu_custom_call.1} parent=31 // pred_check
          %p261 = pneg %p97
        $region38: #{tpu_custom_call.1} parent=31 // pred_check_branch
          %263 = sbr.rel (%p261) target = $region40
        $region39: #{tpu_custom_call.1} parent=31 // pred_region
          %265 = dma.done %s257, 128
        $region40: #{tpu_custom_call.1} parent=31 // pred_fallthru
          _
        %s266 = sand.u32 %s23, 1
        %s267 = scalar_lea.sflag [#allocation6], %s266
        %s268 = sand.u32 %s112, 1
        %s269 = smul.addr %s268, 2
        %s270 = scalar_lea.vmem [#allocation7], %s269
        // Predicated region
        $region41: #{tpu_custom_call.1} parent=31 // pred_check
          %p271 = pneg %p125
        $region42: #{tpu_custom_call.1} parent=31 // pred_check_branch
          %273 = sbr.rel (%p271) target = $region44
        $region43: #{tpu_custom_call.1} parent=31 // pred_region
          %275 = dma.done %s267, 32
        $region44: #{tpu_custom_call.1} parent=31 // pred_fallthru
          _
        %s276 = sand.u32 %s54, 1
        %s277 = scalar_lea.sflag [#allocation3], %s276
        %s278 = sand.u32 %s54, 1
        %s279 = smul.addr %s278, 8
        %s280 = scalar_lea.vmem [#allocation2], %s279
        %p281 = pneg %p67
        %p282 = pneg %p64
        %s283 = sand.u32 %s23, 1
        %s284 = scalar_lea.sflag [#allocation6], %s283
        %s285 = sand.u32 %s84, 1
        %s286 = smul.addr %s285, 8
        %s287 = scalar_lea.vmem [#allocation5], %s286
        %p288 = pneg %p97
        %p289 = pneg %p94
        %s290 = sand.u32 %s23, 1
        %s291 = scalar_lea.sflag [#allocation6], %s290
        %s292 = sand.u32 %s112, 1
        %s293 = smul.addr %s292, 2
        %s294 = scalar_lea.vmem [#allocation7], %s293
        %p295 = pneg %p125
        %p296 = pneg %p122
        %p297 = pneg %p151
        %p298 = pneg %p148
        %s299 = sand.u32 %s138, 1
        %s300 = scalar_lea.sflag [#allocation4], %s299
        %s301 = sand.u32 %s138, 1
        %s302 = scalar_lea.vmem [#allocation8], %s301
        %s303 = smul.u32 2, %s29
        %s304 = smul.u32 2, %s29
        %s305 = smul.u32 2, %s29
        %p306 = scmp.eq.s32.totalorder %s29, 0
        %p307 = scmp.eq.s32.totalorder %s30, 0
        %p308 = pnand %p306, %p307
        %p309 = pneg %p308
        // Predicated region
        $region45: #{tpu_custom_call.1} parent=31 // pred_check
          _
        $region46: #{tpu_custom_call.1} parent=31 // pred_check_branch
          %311 = sbr.rel (%p308) target = $region48
        $region47: #{tpu_custom_call.1} parent=31 // pred_region
          %312 = vst [vmem:[%s302] sm:$0x1] 0.0
        $region48: #{tpu_custom_call.1} parent=31 // pred_fallthru
          _
        %v313 = vld [vmem:[%s250] sm:$0xff]
        %v314 = vld [vmem:[%s260] sm:$0xff]
        %v315 = vld [vmem:[%s270] sm:$0x3]
        %v316 = vsub.f32 %v313, %v314
        %v317 = vmul.f32 %v316, %v316
        %v319 = vperm.slane %v315, 0
        %v320 = vperm.slane %v315, 1
        %v321 = vrot.slane %v320, 4
        %vm322 = vcmask 1043456
        %v323 = vsel %vm322, %v319, %v321
        %v325 = vmul.f32 %v317, %v323
        %327 = vst [vmem:[#allocation1] ss:$2 sm:$0xff] %v325
        %v328 = vld.sshfl [vmem:[#allocation1] sm:$0xff pattern:$0x75316420]
        %v329 = vld.sshfl [vmem:[#allocation1 + $0x8] sm:$0xff pattern:$0x75316420]
        %v332 = vsel %vm322, %v328, 0.0
        %v333 = vsel %vm322, %v329, 0.0
        %v334 = vadd.f32 %v332, %v333
        %335 = vadd.xlane.f32.xlu0 %v334
        %v336 = vpop.xlane.xlu0 %335
        %v337 = vrot.slane %v336, 4
        %v338 = vadd.f32 %v336, %v337
        %v339 = vrot.slane %v338, 2
        %v340 = vadd.f32 %v338, %v339
        %v341 = vrot.slane %v340, 1
        %v342 = vadd.f32 %v340, %v341
        %v343 = vld [vmem:[%s302] sm:$0x1]
        %v344 = vadd.f32 %v343, %v342
        %345 = vst [vmem:[%s302] sm:$0x1] %v344
        // Predicated region
        $region49: #{tpu_custom_call.1} parent=31 // pred_check
          _
        $region50: #{tpu_custom_call.1} parent=31 // pred_check_branch
          %347 = sbr.rel (%p308) target = $region52
        $region51: #{tpu_custom_call.1} parent=31 // pred_region
          %v348 = vld [vmem:[%s302] sm:$0x1]
          %v349 = vmul.f32 %v348, 0.0009765625
          %350 = vst [vmem:[%s302] sm:$0x1] %v349
        $region52: #{tpu_custom_call.1} parent=31 // pred_fallthru
          _
        %s351 = sand.u32 %s138, 1
        %s352 = scalar_lea.sflag [#allocation4], %s351
        %s353 = sand.u32 %s138, 1
        %s354 = scalar_lea.vmem [#allocation8], %s353
        // Predicated region
        $region53: #{tpu_custom_call.1} parent=31 // pred_check
          %p355 = pneg %p148
        $region54: #{tpu_custom_call.1} parent=31 // pred_check_branch
          %357 = sbr.rel (%p355) target = $region56
        $region55: #{tpu_custom_call.1} parent=31 // pred_region
          %359 = vsyncadd %s352, 0
          %s360 = scalar_lea.hbm %s3, %s28
          %s362 = sshll.u32 %s354, 4
          %s363 = int_to_ptr.vmem [resolvable:$true] %s362
          %s364 = sshll.u32 %s360, 4
          %s365 = int_to_ptr.hbm [resolvable:$true] %s364
          %367 = dma.vmem_to_hbm [thread:$0]  %s363, 16, %s365, %s352
        $region56: #{tpu_custom_call.1} parent=31 // pred_fallthru
          _
      $region32: #{tpu_custom_call.1} parent=5 // pred_fallthru
        _
      %p368 = scmp.le.s32.totalorder 2, %s18
      // Predicated region
      $region57: #{tpu_custom_call.1} parent=5 // pred_check
        %p369 = pneg %p368
      $region58: #{tpu_custom_call.1} parent=5 // pred_check_branch
        %371 = sbr.rel (%p369) target = $region60
      $region59: #{tpu_custom_call.1} parent=5 // pred_region
        %s372 = ssub.s32 %s18, 2
        // Predicated region
        $region61: #{tpu_custom_call.1} parent=59 // pred_check
          %p373 = pneg %p154
        $region62: #{tpu_custom_call.1} parent=59 // pred_check_branch
          %375 = sbr.rel (%p373) target = $region64
        $region63: #{tpu_custom_call.1} parent=59 // pred_region
          %s376 = sand.u32 %s139, 1
          %s377 = scalar_lea.sflag [#allocation4], %s376
          %s378 = sand.u32 %s139, 1
          %s379 = scalar_lea.vmem [#allocation8], %s378
          %381 = dma.done %s377, 16
        $region64: #{tpu_custom_call.1} parent=59 // pred_fallthru
          _
      $region60: #{tpu_custom_call.1} parent=5 // pred_fallthru
        _
    $region6: #{tpu_custom_call.1} parent=1 // loop_footer
      %s22 = sadd.s32 1, %s18
    $region7: #{tpu_custom_call.1} parent=1 // loop_footer_branch
      %17 = sbr.rel target = $region3
    $region8: #{tpu_custom_call.1} parent=1 // loop_exit
      _
    %382 = vsyncpa [#allocation3], 1
    %s383 = scalar_lea.sflag [#allocation3], 1
    %384 = vsyncpa %s383, 1
    %385 = vsyncpa [#allocation6], 1
    %s386 = scalar_lea.sflag [#allocation6], 1
    %387 = vsyncpa %s386, 1
    %388 = vsyncpa [#allocation4], 1
    %s389 = scalar_lea.sflag [#allocation4], 1
    %390 = vsyncpa %s389, 1

</llo_original>
